<compile_context>
chip_gen: v5e
topology: v5e:2x2
jax: 0.10.0
libtpu: 0.0.40
codegen_flags: <defaults>
</compile_context>

<pallas_src>
import jax
import jax.numpy as jnp
from jax import lax
from jax.experimental import pallas as pl
from jax.experimental.pallas import tpu as pltpu


def _softplus(x):
    return jnp.logaddexp(x, 0.0)


def _log_g(x):
    # torch: where(x >= 0, log(relu(x) + 0.5), -softplus(-x))
    return jnp.where(x >= 0, jnp.log(jnp.maximum(x, 0.0) + 0.5), -_softplus(-x))


def _minlstm_kernel(x_ref, h0_ref, w_ref, b_ref, out_ref):
    """Fused: one matmul -> gates -> stable scan -> lane-dense single store."""
    t_len = x_ref.shape[0]
    h = w_ref.shape[1] // 3
    h1 = h + 1

    # One MXU push for all three linear layers (f | i | h fused on the lane dim).
    lin = jnp.dot(x_ref[...], w_ref[...],
                  preferred_element_type=jnp.float32,
                  precision=lax.Precision.HIGHEST) + b_ref[...]            # (T, 3H)
    f_lin = lin[:, 0:h]
    i_lin = lin[:, h:2 * h]
    h_lin_last = lin[t_len - 1:t_len, 2 * h:3 * h]                         # (1, H)

    diff = _softplus(-f_lin) - _softplus(-i_lin)                           # (T, H)
    ef = jnp.exp(-_softplus(diff))                                         # exp(log_f) in (0, 1]

    # log_values row:  v = cat(log_g(h0), (log_i + log_tilde_h)[:, -1, :]) ; ev = exp(v)
    log_i_last = -_softplus(-diff[t_len - 1:t_len, :])                     # (1, H)
    log_th_last = _log_g(h_lin_last)                                       # (1, H)
    log_h0 = _log_g(h0_ref[...])                                           # (1, H)
    ev = jnp.exp(jnp.concatenate([log_h0, log_i_last + log_th_last], axis=1))  # (1, 2H)

    # Stable scan: g[t,j] = sum_{s<=t} exp(a*[t,j]-a*[s,j]);  j = 0 is the pad column.
    ef_pad = jnp.concatenate([jnp.ones((t_len, 1), jnp.float32), ef], axis=1)  # (T, H+1)
    rows = [jnp.ones((1, h1), jnp.float32)]
    for step in range(1, t_len):                     # T=8 static unroll, (1,H+1) rows
        rows.append(1.0 + ef_pad[step:step + 1, :] * rows[-1])
    g = jnp.concatenate(rows, axis=0)                                      # (T, H+1)

    # out[t, j*2H + m] = g[t, j] * ev[m]  -> lane-dense (T, (H+1)*2H), one full store.
    cols = [g[:, j:j + 1] * ev for j in range(h1)]
    out_ref[...] = jnp.concatenate(cols, axis=1)


def minlstm_forward(x, h0, wf, bf, wi, bi, wh, bh):
    """x: (1, T, I), h0: (1, H), weights (I, H), biases (H,) -> (1, T, H+1, 2H)."""
    b, t, _ = x.shape
    h = wf.shape[1]
    assert b == 1, "reference broadcasting is only well-defined for batch == 1"
    assert h0.shape == (b, h)

    # Fuse the three linear layers once (in real use these would be pre-fused).
    w3 = jnp.concatenate([wf, wi, wh], axis=1)                 # (I, 3H)
    b3 = jnp.concatenate([bf, bi, bh]).reshape(1, 3 * h)       # (1, 3H)

    vmem = lambda: pl.BlockSpec(memory_space=pltpu.MemorySpace.VMEM)
    # TODO(synk): with batch == 1 there is no grid to shard, so v7x's second
    # TensorCore stays idle; a leading "parallel" grid axis would be added for B > 1.
    out2d = pl.pallas_call(
        _minlstm_kernel,
        out_shape=jax.ShapeDtypeStruct((t, (h + 1) * 2 * h), jnp.float32),
        in_specs=[vmem(), vmem(), vmem(), vmem()],
        out_specs=vmem(),
    )(x[0], h0, w3, b3)
    # metadata-only reshape back to the reference layout (B, T, H+1, 2H)
    return out2d.reshape(b, t, h + 1, 2 * h)


def _reference(x, h0, wf, bf, wi, bi, wh, bh):
    """Literal jnp transcription of the torch MinLSTM forward (B == 1)."""
    hp = lax.Precision.HIGHEST
    f_lin = jnp.einsum("bti,ih->bth", x, wf, precision=hp) + bf
    i_lin = jnp.einsum("bti,ih->bth", x, wi, precision=hp) + bi
    h_lin = jnp.einsum("bti,ih->bth", x, wh, precision=hp) + bh
    diff = _softplus(-f_lin) - _softplus(-i_lin)
    log_f = -_softplus(diff)
    log_i = -_softplus(-diff)
    log_h0 = _log_g(h0)                                        # (B, H)
    log_tilde_h = _log_g(h_lin)
    logs_2d = (log_i + log_tilde_h)[:, -1, :]                  # (B, H)
    log_values = jnp.concatenate([log_h0, logs_2d], axis=1)    # (B, 2H)
    a_star = jnp.pad(jnp.cumsum(log_f, axis=1), ((0, 0), (0, 0), (1, 0)))  # (B,T,H+1)
    d = log_values - a_star[..., None]                         # (B, T, H+1, 2H) for B == 1
    lcse = lax.cumlogsumexp(d, axis=1)
    return jnp.exp(a_star[..., None] + lcse)


if __name__ == "__main__":
    INPUT_SIZE, HIDDEN_SIZE, SEQ, BATCH = 16, 8, 8, 1
    key = jax.random.PRNGKey(0)
    k = jax.random.split(key, 8)
    bound = 1.0 / (INPUT_SIZE ** 0.5)                          # PyTorch Linear default init range
    wf = jax.random.uniform(k[0], (INPUT_SIZE, HIDDEN_SIZE), jnp.float32, -bound, bound)
    bf = jax.random.uniform(k[1], (HIDDEN_SIZE,), jnp.float32, -bound, bound)
    wi = jax.random.uniform(k[2], (INPUT_SIZE, HIDDEN_SIZE), jnp.float32, -bound, bound)
    bi = jax.random.uniform(k[3], (HIDDEN_SIZE,), jnp.float32, -bound, bound)
    wh = jax.random.uniform(k[4], (INPUT_SIZE, HIDDEN_SIZE), jnp.float32, -bound, bound)
    bh = jax.random.uniform(k[5], (HIDDEN_SIZE,), jnp.float32, -bound, bound)
    x = jax.random.normal(k[6], (BATCH, SEQ, INPUT_SIZE), jnp.float32)
    h0 = jax.random.normal(k[7], (BATCH, HIDDEN_SIZE), jnp.float32)

    out = jax.jit(minlstm_forward)(x, h0, wf, bf, wi, bi, wh, bh)
    out = jax.block_until_ready(out)
    assert out.shape == (BATCH, SEQ, HIDDEN_SIZE + 1, 2 * HIDDEN_SIZE), out.shape

    ref = _reference(x, h0, wf, bf, wi, bi, wh, bh)
    max_err = float(jnp.max(jnp.abs(out - ref)))
    if max_err > 1e-2:
        raise AssertionError(f"mismatch vs reference, max abs err = {max_err}")
    print("KERNEL_OK")
</pallas_src>

<mosaic_0001>
module attributes {stable_mosaic.version = 11 : i64} {
  func.func @_minlstm_kernel(%arg0: memref<8x16xf32, #tpu.memory_space<vmem>>, %arg1: memref<1x8xf32, #tpu.memory_space<vmem>>, %arg2: memref<16x24xf32, #tpu.memory_space<vmem>>, %arg3: memref<1x24xf32, #tpu.memory_space<vmem>>, %arg4: memref<8x144xf32, #tpu.memory_space<vmem>>) attributes {dimension_semantics = [], scalar_prefetch = 0 : i64, scratch_operands = 0 : i64, tpu.core_type = #tpu.core_type<tc>} {
    %c0 = arith.constant 0 : index
    %c0_0 = arith.constant 0 : index
    %0 = vector.load %arg0[%c0, %c0_0] : memref<8x16xf32, #tpu.memory_space<vmem>>, vector<8x16xf32>
    %c0_1 = arith.constant 0 : index
    %c0_2 = arith.constant 0 : index
    %1 = vector.load %arg2[%c0_1, %c0_2] : memref<16x24xf32, #tpu.memory_space<vmem>>, vector<16x24xf32>
    %cst = arith.constant dense<0.000000e+00> : vector<8x24xf32>
    %2 = tpu.matmul %0, %1, %cst {dimension_numbers = #tpu.dot_dimension_numbers<[1], [0], [0], [1], [0, 0, 1, 1], [], []>, precision = #tpu.contract_precision<fp32>} : vector<8x16xf32>, vector<16x24xf32>, vector<8x24xf32> -> vector<8x24xf32>
    %c0_3 = arith.constant 0 : index
    %c0_4 = arith.constant 0 : index
    %3 = vector.load %arg3[%c0_3, %c0_4] : memref<1x24xf32, #tpu.memory_space<vmem>>, vector<1x24xf32>
    %4 = vector.broadcast %3 : vector<1x24xf32> to vector<8x24xf32>
    %5 = arith.addf %2, %4 : vector<8x24xf32>
    %6 = vector.extract_strided_slice %5 {offsets = [0, 0], sizes = [8, 8], strides = [1, 1]} : vector<8x24xf32> to vector<8x8xf32>
    %7 = vector.extract_strided_slice %5 {offsets = [0, 8], sizes = [8, 8], strides = [1, 1]} : vector<8x24xf32> to vector<8x8xf32>
    %8 = vector.extract_strided_slice %5 {offsets = [7, 16], sizes = [1, 8], strides = [1, 1]} : vector<8x24xf32> to vector<1x8xf32>
    %cst_5 = arith.constant 0.000000e+00 : f32
    %9 = vector.broadcast %cst_5 : f32 to vector<8x8xf32>
    %10 = arith.subf %9, %6 : vector<8x8xf32>
    %cst_6 = arith.constant 0.000000e+00 : f32
    %11 = vector.broadcast %cst_6 : f32 to vector<8x8xf32>
    %12 = arith.maximumf %10, %11 : vector<8x8xf32>
    %13 = vector.broadcast %cst_6 : f32 to vector<8x8xf32>
    %14 = arith.subf %10, %13 : vector<8x8xf32>
    %15 = arith.cmpf one, %14, %14 : vector<8x8xf32>
    %16 = vector.broadcast %cst_6 : f32 to vector<8x8xf32>
    %17 = arith.addf %10, %16 : vector<8x8xf32>
    %18 = math.absf %14 : vector<8x8xf32>
    %cst_7 = arith.constant 0.000000e+00 : f32
    %19 = vector.broadcast %cst_7 : f32 to vector<8x8xf32>
    %20 = arith.subf %19, %18 : vector<8x8xf32>
    %21 = math.exp %20 : vector<8x8xf32>
    %22 = math.log1p %21 : vector<8x8xf32>
    %23 = arith.addf %12, %22 : vector<8x8xf32>
    %24 = arith.select %15, %17, %23 : vector<8x8xi1>, vector<8x8xf32>
    %cst_8 = arith.constant 0.000000e+00 : f32
    %25 = vector.broadcast %cst_8 : f32 to vector<8x8xf32>
    %26 = arith.subf %25, %7 : vector<8x8xf32>
    %cst_9 = arith.constant 0.000000e+00 : f32
    %27 = vector.broadcast %cst_9 : f32 to vector<8x8xf32>
    %28 = arith.maximumf %26, %27 : vector<8x8xf32>
    %29 = vector.broadcast %cst_9 : f32 to vector<8x8xf32>
    %30 = arith.subf %26, %29 : vector<8x8xf32>
    %31 = arith.cmpf one, %30, %30 : vector<8x8xf32>
    %32 = vector.broadcast %cst_9 : f32 to vector<8x8xf32>
    %33 = arith.addf %26, %32 : vector<8x8xf32>
    %34 = math.absf %30 : vector<8x8xf32>
    %cst_10 = arith.constant 0.000000e+00 : f32
    %35 = vector.broadcast %cst_10 : f32 to vector<8x8xf32>
    %36 = arith.subf %35, %34 : vector<8x8xf32>
    %37 = math.exp %36 : vector<8x8xf32>
    %38 = math.log1p %37 : vector<8x8xf32>
    %39 = arith.addf %28, %38 : vector<8x8xf32>
    %40 = arith.select %31, %33, %39 : vector<8x8xi1>, vector<8x8xf32>
    %41 = arith.subf %24, %40 : vector<8x8xf32>
    %cst_11 = arith.constant 0.000000e+00 : f32
    %42 = vector.broadcast %cst_11 : f32 to vector<8x8xf32>
    %43 = arith.maximumf %41, %42 : vector<8x8xf32>
    %44 = vector.broadcast %cst_11 : f32 to vector<8x8xf32>
    %45 = arith.subf %41, %44 : vector<8x8xf32>
    %46 = arith.cmpf one, %45, %45 : vector<8x8xf32>
    %47 = vector.broadcast %cst_11 : f32 to vector<8x8xf32>
    %48 = arith.addf %41, %47 : vector<8x8xf32>
    %49 = math.absf %45 : vector<8x8xf32>
    %cst_12 = arith.constant 0.000000e+00 : f32
    %50 = vector.broadcast %cst_12 : f32 to vector<8x8xf32>
    %51 = arith.subf %50, %49 : vector<8x8xf32>
    %52 = math.exp %51 : vector<8x8xf32>
    %53 = math.log1p %52 : vector<8x8xf32>
    %54 = arith.addf %43, %53 : vector<8x8xf32>
    %55 = arith.select %46, %48, %54 : vector<8x8xi1>, vector<8x8xf32>
    %cst_13 = arith.constant 0.000000e+00 : f32
    %56 = vector.broadcast %cst_13 : f32 to vector<8x8xf32>
    %57 = arith.subf %56, %55 : vector<8x8xf32>
    %58 = math.exp %57 : vector<8x8xf32>
    %59 = vector.extract_strided_slice %41 {offsets = [7, 0], sizes = [1, 8], strides = [1, 1]} : vector<8x8xf32> to vector<1x8xf32>
    %cst_14 = arith.constant 0.000000e+00 : f32
    %60 = vector.broadcast %cst_14 : f32 to vector<1x8xf32>
    %61 = arith.subf %60, %59 : vector<1x8xf32>
    %cst_15 = arith.constant 0.000000e+00 : f32
    %62 = vector.broadcast %cst_15 : f32 to vector<1x8xf32>
    %63 = arith.maximumf %61, %62 : vector<1x8xf32>
    %64 = vector.broadcast %cst_15 : f32 to vector<1x8xf32>
    %65 = arith.subf %61, %64 : vector<1x8xf32>
    %66 = arith.cmpf one, %65, %65 : vector<1x8xf32>
    %67 = vector.broadcast %cst_15 : f32 to vector<1x8xf32>
    %68 = arith.addf %61, %67 : vector<1x8xf32>
    %69 = math.absf %65 : vector<1x8xf32>
    %cst_16 = arith.constant 0.000000e+00 : f32
    %70 = vector.broadcast %cst_16 : f32 to vector<1x8xf32>
    %71 = arith.subf %70, %69 : vector<1x8xf32>
    %72 = math.exp %71 : vector<1x8xf32>
    %73 = math.log1p %72 : vector<1x8xf32>
    %74 = arith.addf %63, %73 : vector<1x8xf32>
    %75 = arith.select %66, %68, %74 : vector<1x8xi1>, vector<1x8xf32>
    %cst_17 = arith.constant 0.000000e+00 : f32
    %76 = vector.broadcast %cst_17 : f32 to vector<1x8xf32>
    %77 = arith.subf %76, %75 : vector<1x8xf32>
    %cst_18 = arith.constant 0.000000e+00 : f32
    %78 = vector.broadcast %cst_18 : f32 to vector<1x8xf32>
    %79 = arith.cmpf oge, %8, %78 : vector<1x8xf32>
    %cst_19 = arith.constant 0.000000e+00 : f32
    %80 = vector.broadcast %cst_19 : f32 to vector<1x8xf32>
    %81 = arith.maximumf %8, %80 : vector<1x8xf32>
    %cst_20 = arith.constant 5.000000e-01 : f32
    %82 = vector.broadcast %cst_20 : f32 to vector<1x8xf32>
    %83 = arith.addf %81, %82 : vector<1x8xf32>
    %84 = math.log %83 : vector<1x8xf32>
    %cst_21 = arith.constant 0.000000e+00 : f32
    %85 = vector.broadcast %cst_21 : f32 to vector<1x8xf32>
    %86 = arith.subf %85, %8 : vector<1x8xf32>
    %cst_22 = arith.constant 0.000000e+00 : f32
    %87 = vector.broadcast %cst_22 : f32 to vector<1x8xf32>
    %88 = arith.maximumf %86, %87 : vector<1x8xf32>
    %89 = vector.broadcast %cst_22 : f32 to vector<1x8xf32>
    %90 = arith.subf %86, %89 : vector<1x8xf32>
    %91 = arith.cmpf one, %90, %90 : vector<1x8xf32>
    %92 = vector.broadcast %cst_22 : f32 to vector<1x8xf32>
    %93 = arith.addf %86, %92 : vector<1x8xf32>
    %94 = math.absf %90 : vector<1x8xf32>
    %cst_23 = arith.constant 0.000000e+00 : f32
    %95 = vector.broadcast %cst_23 : f32 to vector<1x8xf32>
    %96 = arith.subf %95, %94 : vector<1x8xf32>
    %97 = math.exp %96 : vector<1x8xf32>
    %98 = math.log1p %97 : vector<1x8xf32>
    %99 = arith.addf %88, %98 : vector<1x8xf32>
    %100 = arith.select %91, %93, %99 : vector<1x8xi1>, vector<1x8xf32>
    %cst_24 = arith.constant 0.000000e+00 : f32
    %101 = vector.broadcast %cst_24 : f32 to vector<1x8xf32>
    %102 = arith.subf %101, %100 : vector<1x8xf32>
    %103 = arith.select %79, %84, %102 : vector<1x8xi1>, vector<1x8xf32>
    %c0_25 = arith.constant 0 : index
    %c0_26 = arith.constant 0 : index
    %104 = vector.load %arg1[%c0_25, %c0_26] : memref<1x8xf32, #tpu.memory_space<vmem>>, vector<1x8xf32>
    %cst_27 = arith.constant 0.000000e+00 : f32
    %105 = vector.broadcast %cst_27 : f32 to vector<1x8xf32>
    %106 = arith.cmpf oge, %104, %105 : vector<1x8xf32>
    %cst_28 = arith.constant 0.000000e+00 : f32
    %107 = vector.broadcast %cst_28 : f32 to vector<1x8xf32>
    %108 = arith.maximumf %104, %107 : vector<1x8xf32>
    %cst_29 = arith.constant 5.000000e-01 : f32
    %109 = vector.broadcast %cst_29 : f32 to vector<1x8xf32>
    %110 = arith.addf %108, %109 : vector<1x8xf32>
    %111 = math.log %110 : vector<1x8xf32>
    %cst_30 = arith.constant 0.000000e+00 : f32
    %112 = vector.broadcast %cst_30 : f32 to vector<1x8xf32>
    %113 = arith.subf %112, %104 : vector<1x8xf32>
    %cst_31 = arith.constant 0.000000e+00 : f32
    %114 = vector.broadcast %cst_31 : f32 to vector<1x8xf32>
    %115 = arith.maximumf %113, %114 : vector<1x8xf32>
    %116 = vector.broadcast %cst_31 : f32 to vector<1x8xf32>
    %117 = arith.subf %113, %116 : vector<1x8xf32>
    %118 = arith.cmpf one, %117, %117 : vector<1x8xf32>
    %119 = vector.broadcast %cst_31 : f32 to vector<1x8xf32>
    %120 = arith.addf %113, %119 : vector<1x8xf32>
    %121 = math.absf %117 : vector<1x8xf32>
    %cst_32 = arith.constant 0.000000e+00 : f32
    %122 = vector.broadcast %cst_32 : f32 to vector<1x8xf32>
    %123 = arith.subf %122, %121 : vector<1x8xf32>
    %124 = math.exp %123 : vector<1x8xf32>
    %125 = math.log1p %124 : vector<1x8xf32>
    %126 = arith.addf %115, %125 : vector<1x8xf32>
    %127 = arith.select %118, %120, %126 : vector<1x8xi1>, vector<1x8xf32>
    %cst_33 = arith.constant 0.000000e+00 : f32
    %128 = vector.broadcast %cst_33 : f32 to vector<1x8xf32>
    %129 = arith.subf %128, %127 : vector<1x8xf32>
    %130 = arith.select %106, %111, %129 : vector<1x8xi1>, vector<1x8xf32>
    %131 = arith.addf %77, %103 : vector<1x8xf32>
    %132 = tpu.concatenate %130, %131 in 1 : vector<1x8xf32>, vector<1x8xf32> -> vector<1x16xf32>
    %133 = math.exp %132 : vector<1x16xf32>
    %cst_34 = arith.constant 1.000000e+00 : f32
    %134 = vector.broadcast %cst_34 : f32 to vector<8x1xf32>
    %135 = tpu.concatenate %134, %58 in 1 : vector<8x1xf32>, vector<8x8xf32> -> vector<8x9xf32>
    %cst_35 = arith.constant 1.000000e+00 : f32
    %136 = vector.broadcast %cst_35 : f32 to vector<1x9xf32>
    %137 = vector.extract_strided_slice %135 {offsets = [1, 0], sizes = [1, 9], strides = [1, 1]} : vector<8x9xf32> to vector<1x9xf32>
    %138 = arith.mulf %137, %136 : vector<1x9xf32>
    %cst_36 = arith.constant 1.000000e+00 : f32
    %139 = vector.broadcast %cst_36 : f32 to vector<1x9xf32>
    %140 = arith.addf %139, %138 : vector<1x9xf32>
    %141 = vector.extract_strided_slice %135 {offsets = [2, 0], sizes = [1, 9], strides = [1, 1]} : vector<8x9xf32> to vector<1x9xf32>
    %142 = arith.mulf %141, %140 : vector<1x9xf32>
    %cst_37 = arith.constant 1.000000e+00 : f32
    %143 = vector.broadcast %cst_37 : f32 to vector<1x9xf32>
    %144 = arith.addf %143, %142 : vector<1x9xf32>
    %145 = vector.extract_strided_slice %135 {offsets = [3, 0], sizes = [1, 9], strides = [1, 1]} : vector<8x9xf32> to vector<1x9xf32>
    %146 = arith.mulf %145, %144 : vector<1x9xf32>
    %cst_38 = arith.constant 1.000000e+00 : f32
    %147 = vector.broadcast %cst_38 : f32 to vector<1x9xf32>
    %148 = arith.addf %147, %146 : vector<1x9xf32>
    %149 = vector.extract_strided_slice %135 {offsets = [4, 0], sizes = [1, 9], strides = [1, 1]} : vector<8x9xf32> to vector<1x9xf32>
    %150 = arith.mulf %149, %148 : vector<1x9xf32>
    %cst_39 = arith.constant 1.000000e+00 : f32
    %151 = vector.broadcast %cst_39 : f32 to vector<1x9xf32>
    %152 = arith.addf %151, %150 : vector<1x9xf32>
    %153 = vector.extract_strided_slice %135 {offsets = [5, 0], sizes = [1, 9], strides = [1, 1]} : vector<8x9xf32> to vector<1x9xf32>
    %154 = arith.mulf %153, %152 : vector<1x9xf32>
    %cst_40 = arith.constant 1.000000e+00 : f32
    %155 = vector.broadcast %cst_40 : f32 to vector<1x9xf32>
    %156 = arith.addf %155, %154 : vector<1x9xf32>
    %157 = vector.extract_strided_slice %135 {offsets = [6, 0], sizes = [1, 9], strides = [1, 1]} : vector<8x9xf32> to vector<1x9xf32>
    %158 = arith.mulf %157, %156 : vector<1x9xf32>
    %cst_41 = arith.constant 1.000000e+00 : f32
    %159 = vector.broadcast %cst_41 : f32 to vector<1x9xf32>
    %160 = arith.addf %159, %158 : vector<1x9xf32>
    %161 = vector.extract_strided_slice %135 {offsets = [7, 0], sizes = [1, 9], strides = [1, 1]} : vector<8x9xf32> to vector<1x9xf32>
    %162 = arith.mulf %161, %160 : vector<1x9xf32>
    %cst_42 = arith.constant 1.000000e+00 : f32
    %163 = vector.broadcast %cst_42 : f32 to vector<1x9xf32>
    %164 = arith.addf %163, %162 : vector<1x9xf32>
    %165 = tpu.concatenate %136, %140, %144, %148, %152, %156, %160, %164 in 0 : vector<1x9xf32>, vector<1x9xf32>, vector<1x9xf32>, vector<1x9xf32>, vector<1x9xf32>, vector<1x9xf32>, vector<1x9xf32>, vector<1x9xf32> -> vector<8x9xf32>
    %166 = vector.extract_strided_slice %165 {offsets = [0, 0], sizes = [8, 1], strides = [1, 1]} : vector<8x9xf32> to vector<8x1xf32>
    %167 = vector.broadcast %166 : vector<8x1xf32> to vector<8x16xf32>
    %168 = vector.broadcast %133 : vector<1x16xf32> to vector<8x16xf32>
    %169 = arith.mulf %167, %168 : vector<8x16xf32>
    %170 = vector.extract_strided_slice %165 {offsets = [0, 1], sizes = [8, 1], strides = [1, 1]} : vector<8x9xf32> to vector<8x1xf32>
    %171 = vector.broadcast %170 : vector<8x1xf32> to vector<8x16xf32>
    %172 = vector.broadcast %133 : vector<1x16xf32> to vector<8x16xf32>
    %173 = arith.mulf %171, %172 : vector<8x16xf32>
    %174 = vector.extract_strided_slice %165 {offsets = [0, 2], sizes = [8, 1], strides = [1, 1]} : vector<8x9xf32> to vector<8x1xf32>
    %175 = vector.broadcast %174 : vector<8x1xf32> to vector<8x16xf32>
    %176 = vector.broadcast %133 : vector<1x16xf32> to vector<8x16xf32>
    %177 = arith.mulf %175, %176 : vector<8x16xf32>
    %178 = vector.extract_strided_slice %165 {offsets = [0, 3], sizes = [8, 1], strides = [1, 1]} : vector<8x9xf32> to vector<8x1xf32>
    %179 = vector.broadcast %178 : vector<8x1xf32> to vector<8x16xf32>
    %180 = vector.broadcast %133 : vector<1x16xf32> to vector<8x16xf32>
    %181 = arith.mulf %179, %180 : vector<8x16xf32>
    %182 = vector.extract_strided_slice %165 {offsets = [0, 4], sizes = [8, 1], strides = [1, 1]} : vector<8x9xf32> to vector<8x1xf32>
    %183 = vector.broadcast %182 : vector<8x1xf32> to vector<8x16xf32>
    %184 = vector.broadcast %133 : vector<1x16xf32> to vector<8x16xf32>
    %185 = arith.mulf %183, %184 : vector<8x16xf32>
    %186 = vector.extract_strided_slice %165 {offsets = [0, 5], sizes = [8, 1], strides = [1, 1]} : vector<8x9xf32> to vector<8x1xf32>
    %187 = vector.broadcast %186 : vector<8x1xf32> to vector<8x16xf32>
    %188 = vector.broadcast %133 : vector<1x16xf32> to vector<8x16xf32>
    %189 = arith.mulf %187, %188 : vector<8x16xf32>
    %190 = vector.extract_strided_slice %165 {offsets = [0, 6], sizes = [8, 1], strides = [1, 1]} : vector<8x9xf32> to vector<8x1xf32>
    %191 = vector.broadcast %190 : vector<8x1xf32> to vector<8x16xf32>
    %192 = vector.broadcast %133 : vector<1x16xf32> to vector<8x16xf32>
    %193 = arith.mulf %191, %192 : vector<8x16xf32>
    %194 = vector.extract_strided_slice %165 {offsets = [0, 7], sizes = [8, 1], strides = [1, 1]} : vector<8x9xf32> to vector<8x1xf32>
    %195 = vector.broadcast %194 : vector<8x1xf32> to vector<8x16xf32>
    %196 = vector.broadcast %133 : vector<1x16xf32> to vector<8x16xf32>
    %197 = arith.mulf %195, %196 : vector<8x16xf32>
    %198 = vector.extract_strided_slice %165 {offsets = [0, 8], sizes = [8, 1], strides = [1, 1]} : vector<8x9xf32> to vector<8x1xf32>
    %199 = vector.broadcast %198 : vector<8x1xf32> to vector<8x16xf32>
    %200 = vector.broadcast %133 : vector<1x16xf32> to vector<8x16xf32>
    %201 = arith.mulf %199, %200 : vector<8x16xf32>
    %202 = tpu.concatenate %169, %173, %177, %181, %185, %189, %193, %197, %201 in 1 : vector<8x16xf32>, vector<8x16xf32>, vector<8x16xf32>, vector<8x16xf32>, vector<8x16xf32>, vector<8x16xf32>, vector<8x16xf32>, vector<8x16xf32>, vector<8x16xf32> -> vector<8x144xf32>
    %c0_43 = arith.constant 0 : index
    %c0_44 = arith.constant 0 : index
    %203 = vector.load %arg4[%c0_43, %c0_44] : memref<8x144xf32, #tpu.memory_space<vmem>>, vector<8x144xf32>
    tpu.vector_store %arg4[%c0_43, %c0_44], %202 {strides = array<i32>} : memref<8x144xf32, #tpu.memory_space<vmem>>, vector<8x144xf32>,
    return
  }
}

</mosaic_0001>

<llo_original>
// kernel: minlstm_forward.1
$region0: #{minlstm_forward.1}
  #allocation0 [shape = 'u32[]', space=smem, size = 0x4, offset = 0x4, fixed_abs, tag = 'smem constant byte address 0x4 - core index']
  #allocation1 [shape = 'u32[72,128]{1,0:T(1,128)}', space=vmem, size = 0x9000, scoped, tag = 'internal scratch']
  %s0 = inlined_call_operand.vmem [shape: f32[8,16], index: 0, kind: input, shape index: {}]
  %s1 = inlined_call_operand.vmem [shape: f32[1,8], index: 1, kind: input, shape index: {}]
  %s2 = inlined_call_operand.vmem [shape: f32[16,24], index: 2, kind: input, shape index: {}]
  %s3 = inlined_call_operand.vmem [shape: f32[1,24], index: 3, kind: input, shape index: {}]
  %s4 = inlined_call_operand.vmem [shape: f32[8,144], index: 4, kind: output, shape index: {}]
  %s5 = sld [smem:[#allocation0]]
  $region26: #{minlstm_forward.1} parent=0
    _
  %s7 = ssub.s32 1, %s5
  %s8 = scalar_select 0, %s7, %s5
  // Predicated region
  $region2: #{minlstm_forward.1} parent=0 // pred_check
    _
  $region3: #{minlstm_forward.1} parent=0 // pred_check_branch
    %10 = sbr.rel (0) target = $region5
  $region4: #{minlstm_forward.1} parent=0 // pred_region
    _
  $region5: #{minlstm_forward.1} parent=0 // pred_fallthru
    _
  // Predicated region
  $region6: #{minlstm_forward.1} parent=0 // pred_check
    _
  $region7: #{minlstm_forward.1} parent=0 // pred_check_branch
    %12 = sbr.rel (0) target = $region9
  $region8: #{minlstm_forward.1} parent=0 // pred_region
    _
  $region9: #{minlstm_forward.1} parent=0 // pred_fallthru
    _
  // Predicated region
  $region10: #{minlstm_forward.1} parent=0 // pred_check
    _
  $region11: #{minlstm_forward.1} parent=0 // pred_check_branch
    %14 = sbr.rel (0) target = $region13
  $region12: #{minlstm_forward.1} parent=0 // pred_region
    _
  $region13: #{minlstm_forward.1} parent=0 // pred_fallthru
    _
  // Predicated region
  $region14: #{minlstm_forward.1} parent=0 // pred_check
    _
  $region15: #{minlstm_forward.1} parent=0 // pred_check_branch
    %16 = sbr.rel (0) target = $region17
  $region16: #{minlstm_forward.1} parent=0 // pred_region
    _
  $region17: #{minlstm_forward.1} parent=0 // pred_fallthru
    _
  %v17 = vld [vmem:[%s0] sm:$0xff]
  %v18 = vld [vmem:[%s2] sm:$0xff]
  %v19 = vld [vmem:[%s2 + $0x8] sm:$0xff]
  %v20 = vld [vmem:[%s3] sm:$0x1]
  %v22 = vperm.slane %v20, 0
  %vm24 = vcmask 130048
  %v26 = vsel %vm24, %v17, 0
  %28 = vmatpush.msra.mxu0 0.0
  %29 = vmatpush.msra.mxu0 0.0
  %30 = vmatpush.msra.mxu0 0.0
  %31 = vmatpush.msra.mxu0 0.0
  %32 = vmatpush.msra.mxu0 0.0
  %33 = vmatpush.msra.mxu0 0.0
  %34 = vmatpush.msra.mxu0 0.0
  %35 = vmatpush.msra.mxu0 0.0
  %36 = vmatpush.msra.mxu0 0.0
  %37 = vmatpush.msra.mxu0 0.0
  %38 = vmatpush.msra.mxu0 0.0
  %39 = vmatpush.msra.mxu0 0.0
  %40 = vmatpush.msra.mxu0 0.0
  %41 = vmatpush.msra.mxu0 0.0
  %v42 = vand.u32 %v19, 4294901760
  %43 = vmatpush.msra.mxu0 %v42
  %v44 = vand.u32 %v18, 4294901760
  %45 = vmatpush.msra.mxu0 %v44
  %v46 = vand.u32 %v26, 4294901760
  %v47 = vsub.f32 %v26, %v46
  %v48 = vand.u32 %v47, 4294901760
  %v49 = vsub.f32 %v47, %v48
  %v50 = vand.u32 %v49, 4294901760
  %51 = vmatmul.f32.gmra.mxu0 %v50
  %v52 = vpop.f32.mrf.mxu0
  %v53 = vadd.f32 %v22, %v52
  %54 = vdwg.mxu0
  %55 = vmatpush.msra.mxu0 0.0
  %56 = vmatpush.msra.mxu0 0.0
  %57 = vmatpush.msra.mxu0 0.0
  %58 = vmatpush.msra.mxu0 0.0
  %59 = vmatpush.msra.mxu0 0.0
  %60 = vmatpush.msra.mxu0 0.0
  %61 = vmatpush.msra.mxu0 0.0
  %62 = vmatpush.msra.mxu0 0.0
  %63 = vmatpush.msra.mxu0 0.0
  %64 = vmatpush.msra.mxu0 0.0
  %65 = vmatpush.msra.mxu0 0.0
  %66 = vmatpush.msra.mxu0 0.0
  %67 = vmatpush.msra.mxu0 0.0
  %68 = vmatpush.msra.mxu0 0.0
  %v69 = vand.u32 %v19, 4294901760
  %v70 = vsub.f32 %v19, %v69
  %v71 = vand.u32 %v70, 4294901760
  %v72 = vsub.f32 %v70, %v71
  %v73 = vand.u32 %v72, 4294901760
  %74 = vmatpush.msra.mxu0 %v73
  %v75 = vand.u32 %v18, 4294901760
  %v76 = vsub.f32 %v18, %v75
  %v77 = vand.u32 %v76, 4294901760
  %v78 = vsub.f32 %v76, %v77
  %v79 = vand.u32 %v78, 4294901760
  %80 = vmatpush.msra.mxu0 %v79
  %v81 = vand.u32 %v26, 4294901760
  %82 = vmatmul.f32.gmra.mxu0 %v81
  %v83 = vpop.f32.mrf.mxu0
  %v84 = vadd.f32 %v53, %v83
  %85 = vdwg.mxu0
  %86 = vmatpush.msra.mxu0 0.0
  %87 = vmatpush.msra.mxu0 0.0
  %88 = vmatpush.msra.mxu0 0.0
  %89 = vmatpush.msra.mxu0 0.0
  %90 = vmatpush.msra.mxu0 0.0
  %91 = vmatpush.msra.mxu0 0.0
  %92 = vmatpush.msra.mxu0 0.0
  %93 = vmatpush.msra.mxu0 0.0
  %94 = vmatpush.msra.mxu0 0.0
  %95 = vmatpush.msra.mxu0 0.0
  %96 = vmatpush.msra.mxu0 0.0
  %97 = vmatpush.msra.mxu0 0.0
  %98 = vmatpush.msra.mxu0 0.0
  %99 = vmatpush.msra.mxu0 0.0
  %v100 = vand.u32 %v19, 4294901760
  %v101 = vsub.f32 %v19, %v100
  %102 = vmatpush.msra.mxu0 %v101
  %v103 = vand.u32 %v18, 4294901760
  %v104 = vsub.f32 %v18, %v103
  %105 = vmatpush.msra.mxu0 %v104
  %v106 = vand.u32 %v26, 4294901760
  %v107 = vsub.f32 %v26, %v106
  %108 = vmatmul.f32.gmra.mxu0 %v107
  %v109 = vpop.f32.mrf.mxu0
  %v110 = vadd.f32 %v84, %v109
  %111 = vdwg.mxu0
  %112 = vmatpush.msra.mxu0 0.0
  %113 = vmatpush.msra.mxu0 0.0
  %114 = vmatpush.msra.mxu0 0.0
  %115 = vmatpush.msra.mxu0 0.0
  %116 = vmatpush.msra.mxu0 0.0
  %117 = vmatpush.msra.mxu0 0.0
  %118 = vmatpush.msra.mxu0 0.0
  %119 = vmatpush.msra.mxu0 0.0
  %120 = vmatpush.msra.mxu0 0.0
  %121 = vmatpush.msra.mxu0 0.0
  %122 = vmatpush.msra.mxu0 0.0
  %123 = vmatpush.msra.mxu0 0.0
  %124 = vmatpush.msra.mxu0 0.0
  %125 = vmatpush.msra.mxu0 0.0
  %v126 = vand.u32 %v19, 4294901760
  %127 = vmatpush.msra.mxu0 %v126
  %v128 = vand.u32 %v18, 4294901760
  %129 = vmatpush.msra.mxu0 %v128
  %v130 = vand.u32 %v26, 4294901760
  %v131 = vsub.f32 %v26, %v130
  %v132 = vand.u32 %v131, 4294901760
  %133 = vmatmul.f32.gmra.mxu0 %v132
  %v134 = vpop.f32.mrf.mxu0
  %v135 = vadd.f32 %v110, %v134
  %136 = vdwg.mxu0
  %137 = vmatpush.msra.mxu0 0.0
  %138 = vmatpush.msra.mxu0 0.0
  %139 = vmatpush.msra.mxu0 0.0
  %140 = vmatpush.msra.mxu0 0.0
  %141 = vmatpush.msra.mxu0 0.0
  %142 = vmatpush.msra.mxu0 0.0
  %143 = vmatpush.msra.mxu0 0.0
  %144 = vmatpush.msra.mxu0 0.0
  %145 = vmatpush.msra.mxu0 0.0
  %146 = vmatpush.msra.mxu0 0.0
  %147 = vmatpush.msra.mxu0 0.0
  %148 = vmatpush.msra.mxu0 0.0
  %149 = vmatpush.msra.mxu0 0.0
  %150 = vmatpush.msra.mxu0 0.0
  %v151 = vand.u32 %v19, 4294901760
  %v152 = vsub.f32 %v19, %v151
  %v153 = vand.u32 %v152, 4294901760
  %154 = vmatpush.msra.mxu0 %v153
  %v155 = vand.u32 %v18, 4294901760
  %v156 = vsub.f32 %v18, %v155
  %v157 = vand.u32 %v156, 4294901760
  %158 = vmatpush.msra.mxu0 %v157
  %v159 = vand.u32 %v26, 4294901760
  %160 = vmatmul.f32.gmra.mxu0 %v159
  %v161 = vpop.f32.mrf.mxu0
  %v162 = vadd.f32 %v135, %v161
  %163 = vdwg.mxu0
  %164 = vmatpush.msra.mxu0 0.0
  %165 = vmatpush.msra.mxu0 0.0
  %166 = vmatpush.msra.mxu0 0.0
  %167 = vmatpush.msra.mxu0 0.0
  %168 = vmatpush.msra.mxu0 0.0
  %169 = vmatpush.msra.mxu0 0.0
  %170 = vmatpush.msra.mxu0 0.0
  %171 = vmatpush.msra.mxu0 0.0
  %172 = vmatpush.msra.mxu0 0.0
  %173 = vmatpush.msra.mxu0 0.0
  %174 = vmatpush.msra.mxu0 0.0
  %175 = vmatpush.msra.mxu0 0.0
  %176 = vmatpush.msra.mxu0 0.0
  %177 = vmatpush.msra.mxu0 0.0
  %v178 = vand.u32 %v19, 4294901760
  %179 = vmatpush.msra.mxu0 %v178
  %v180 = vand.u32 %v18, 4294901760
  %181 = vmatpush.msra.mxu0 %v180
  %v182 = vand.u32 %v26, 4294901760
  %183 = vmatmul.f32.gmra.mxu0 %v182
  %v184 = vpop.f32.mrf.mxu0
  %v185 = vadd.f32 %v162, %v184
  %186 = vdwg.mxu0
  %v187 = vsub.f32 0.0, %v185
  %v188 = vmax.f32 %v187, 0.0
  %vm189 = vcmp.ne.f32.partialorder %v187, %v187
  %v190 = vadd.f32 %v187, 0.0
  %v191 = vand.u32 2147483647, %v187
  %v192 = vsub.f32 0.0, %v191
  %v193 = vmul.f32 %v192, 1.442695
  %v194 = vpow.pop %v193
  %v195 = vadd.f32 %v194, 1.0
  %v196 = vlog2.pop %v195
  %v197 = vmul.f32 %v196, 0.6931472
  %v198 = vmul.f32 -0.5, %v194
  %v199 = vadd.f32 %v198, 1.0
  %v200 = vmul.f32 %v199, %v194
  %v201 = vand.u32 2147483647, %v194
  %vm202 = vcmp.lt.f32.partialorder %v201, 0.0004427343
  %v203 = vsel %vm202, %v200, %v197
  %v204 = vadd.f32 %v188, %v203
  %v205 = vsel %vm189, %v190, %v204
  %207 = vrot.lane.b32.xlu0 %v205, 120
  %v208 = vpop.permute.xlu0 %207
  %v210 = vsub.f32 %v205, %v208
  %v211 = vmax.f32 %v210, 0.0
  %vm212 = vcmp.ne.f32.partialorder %v210, %v210
  %v213 = vadd.f32 %v210, 0.0
  %v214 = vand.u32 2147483647, %v210
  %v215 = vsub.f32 0.0, %v214
  %v216 = vmul.f32 %v215, 1.442695
  %v217 = vpow.pop %v216
  %v218 = vadd.f32 %v217, 1.0
  %v219 = vlog2.pop %v218
  %v220 = vmul.f32 %v219, 0.6931472
  %v221 = vmul.f32 -0.5, %v217
  %v222 = vadd.f32 %v221, 1.0
  %v223 = vmul.f32 %v222, %v217
  %v224 = vand.u32 2147483647, %v217
  %vm225 = vcmp.lt.f32.partialorder %v224, 0.0004427343
  %v226 = vsel %vm225, %v223, %v220
  %v227 = vadd.f32 %v211, %v226
  %v228 = vsel %vm212, %v213, %v227
  %v229 = vsub.f32 0.0, %v228
  %v230 = vmul.f32 %v229, 1.442695
  %v231 = vpow.pop %v230
  %v232 = vsub.f32 0.0, %v210
  %v233 = vmax.f32 %v232, 0.0
  %vm234 = vcmp.ne.f32.partialorder %v232, %v232
  %v235 = vadd.f32 %v232, 0.0
  %v236 = vand.u32 2147483647, %v232
  %v237 = vsub.f32 0.0, %v236
  %v238 = vmul.f32 %v237, 1.442695
  %v239 = vpow.pop %v238
  %v240 = vadd.f32 %v239, 1.0
  %v241 = vlog2.pop %v240
  %v242 = vmul.f32 %v241, 0.6931472
  %v243 = vmul.f32 -0.5, %v239
  %v244 = vadd.f32 %v243, 1.0
  %v245 = vmul.f32 %v244, %v239
  %v246 = vand.u32 2147483647, %v239
  %vm247 = vcmp.lt.f32.partialorder %v246, 0.0004427343
  %v248 = vsel %vm247, %v245, %v242
  %v249 = vadd.f32 %v233, %v248
  %v250 = vsel %vm234, %v235, %v249
  %v251 = vsub.f32 0.0, %v250
  %vm252 = vcmp.ge.f32.partialorder %v185, 0.0
  %v253 = vmax.f32 %v185, 0.0
  %v254 = vadd.f32 %v253, 0.5
  %v255 = vlog2.pop %v254
  %v256 = vmul.f32 %v255, 0.6931472
  %v257 = vsub.f32 0.0, %v205
  %v258 = vsel %vm252, %v256, %v257
  %v259 = vld [vmem:[%s1] sm:$0x1]
  %vm260 = vcmp.ge.f32.partialorder %v259, 0.0
  %v261 = vmax.f32 %v259, 0.0
  %v262 = vadd.f32 %v261, 0.5
  %v263 = vlog2.pop %v262
  %v264 = vmul.f32 %v263, 0.6931472
  %v265 = vsub.f32 0.0, %v259
  %v266 = vmax.f32 %v265, 0.0
  %vm267 = vcmp.ne.f32.partialorder %v265, %v265
  %v268 = vadd.f32 %v265, 0.0
  %v269 = vand.u32 2147483647, %v265
  %v270 = vsub.f32 0.0, %v269
  %v271 = vmul.f32 %v270, 1.442695
  %v272 = vpow.pop %v271
  %v273 = vadd.f32 %v272, 1.0
  %v274 = vlog2.pop %v273
  %v275 = vmul.f32 %v274, 0.6931472
  %v276 = vmul.f32 -0.5, %v272
  %v277 = vadd.f32 %v276, 1.0
  %v278 = vmul.f32 %v277, %v272
  %v279 = vand.u32 2147483647, %v272
  %vm280 = vcmp.lt.f32.partialorder %v279, 0.0004427343
  %v281 = vsel %vm280, %v278, %v275
  %v282 = vadd.f32 %v266, %v281
  %v283 = vsel %vm267, %v268, %v282
  %v284 = vsub.f32 0.0, %v283
  %v285 = vsel %vm260, %v264, %v284
  %287 = vrot.lane.b32.xlu0 %v258, 112
  %v288 = vpop.permute.xlu0 %287
  %v290 = vadd.f32 %v251, %v288
  %v292 = vrot.slane %v290, 7
  %293 = vrot.lane.b32.xlu0 %v292, 8
  %v294 = vpop.permute.xlu0 %293
  %vm296 = vcmask 64512
  %v297 = vsel %vm296, %v285, %v294
  %v298 = vmul.f32 %v297, 1.442695
  %v299 = vpow.pop %v298
  %301 = vrot.lane.b32.xlu0 %v231, 1
  %v302 = vpop.permute.xlu0 %301
  %vm304 = vcmask 7168
  %v305 = vsel %vm304, 1.0, %v302
  %v306 = vadd.f32 %v305, 1.0
  %v308 = vrot.slane %v306, 7
  %v310 = vmul.f32 %v305, %v308
  %v311 = vadd.f32 %v310, 1.0
  %v313 = vrot.slane %v311, 7
  %v315 = vmul.f32 %v305, %v313
  %v316 = vadd.f32 %v315, 1.0
  %v318 = vrot.slane %v316, 7
  %v320 = vmul.f32 %v305, %v318
  %v321 = vadd.f32 %v320, 1.0
  %v323 = vrot.slane %v321, 7
  %v325 = vmul.f32 %v305, %v323
  %v326 = vadd.f32 %v325, 1.0
  %v328 = vrot.slane %v326, 7
  %v330 = vmul.f32 %v305, %v328
  %v331 = vadd.f32 %v330, 1.0
  %v333 = vrot.slane %v331, 7
  %v335 = vmul.f32 %v305, %v333
  %v336 = vadd.f32 %v335, 1.0
  %vm337 = vcmask 1040384
  %v338 = vsel %vm337, 1.0, %v306
  %vm339 = vcmask 1041408
  %v340 = vsel %vm339, %v338, %v311
  %vm341 = vcmask 1042432
  %v342 = vsel %vm341, %v340, %v316
  %vm343 = vcmask 1043456
  %v344 = vsel %vm343, %v342, %v321
  %vm345 = vcmask 1044480
  %v346 = vsel %vm345, %v344, %v326
  %vm347 = vcmask 1045504
  %v348 = vsel %vm347, %v346, %v331
  %vm349 = vcmask 1046528
  %v350 = vsel %vm349, %v348, %v336
  %352 = vset.pattern.permute.xlu0 0
  %353 = vperm.xlu0 %352, %v350
  %v354 = vpop.permute.xlu0 %353
  %v356 = vperm.slane %v299, 0
  %v357 = vmul.f32 %v354, %v356
  %358 = vset.pattern.permute.xlu0 1
  %359 = vperm.xlu0 %358, %v350
  %v360 = vpop.permute.xlu0 %359
  %v362 = vmul.f32 %v360, %v356
  %363 = vset.pattern.permute.xlu0 2
  %364 = vperm.xlu0 %363, %v350
  %v365 = vpop.permute.xlu0 %364
  %v367 = vmul.f32 %v365, %v356
  %368 = vset.pattern.permute.xlu0 3
  %369 = vperm.xlu0 %368, %v350
  %v370 = vpop.permute.xlu0 %369
  %v372 = vmul.f32 %v370, %v356
  %373 = vset.pattern.permute.xlu0 4
  %374 = vperm.xlu0 %373, %v350
  %v375 = vpop.permute.xlu0 %374
  %v377 = vmul.f32 %v375, %v356
  %378 = vset.pattern.permute.xlu0 5
  %379 = vperm.xlu0 %378, %v350
  %v380 = vpop.permute.xlu0 %379
  %v382 = vmul.f32 %v380, %v356
  %383 = vset.pattern.permute.xlu0 6
  %384 = vperm.xlu0 %383, %v350
  %v385 = vpop.permute.xlu0 %384
  %v387 = vmul.f32 %v385, %v356
  %388 = vset.pattern.permute.xlu0 7
  %389 = vperm.xlu0 %388, %v350
  %v390 = vpop.permute.xlu0 %389
  %v392 = vmul.f32 %v390, %v356
  %393 = vset.pattern.permute.xlu0 8
  %394 = vperm.xlu0 %393, %v350
  %v395 = vpop.permute.xlu0 %394
  %v397 = vmul.f32 %v395, %v356
  %399 = vrot.lane.b32.xlu0 %v362, 16
  %v400 = vpop.permute.xlu0 %399
  %403 = vrot.lane.b32.xlu0 %v367, 32
  %v404 = vpop.permute.xlu0 %403
  %407 = vrot.lane.b32.xlu0 %v372, 48
  %v408 = vpop.permute.xlu0 %407
  %411 = vrot.lane.b32.xlu0 %v377, 64
  %v412 = vpop.permute.xlu0 %411
  %415 = vrot.lane.b32.xlu0 %v382, 80
  %v416 = vpop.permute.xlu0 %415
  %419 = vrot.lane.b32.xlu0 %v387, 96
  %v420 = vpop.permute.xlu0 %419
  %423 = vrot.lane.b32.xlu0 %v392, 112
  %v424 = vpop.permute.xlu0 %423
  %v426 = vsel %vm24, %v357, %v400
  %vm427 = vcmask 261120
  %v428 = vsel %vm427, %v426, %v404
  %vm429 = vcmask 392192
  %v430 = vsel %vm429, %v428, %v408
  %vm431 = vcmask 523264
  %v432 = vsel %vm431, %v430, %v412
  %vm433 = vcmask 654336
  %v434 = vsel %vm433, %v432, %v416
  %vm435 = vcmask 785408
  %v436 = vsel %vm435, %v434, %v420
  %vm437 = vcmask 916480
  %v438 = vsel %vm437, %v436, %v424
  %439 = vst [vmem:[%s4] sm:$0xff] %v438
  %440 = vst.msk [vmem:[%s4 + $0x8] sm:$0xff] %vm24, %v397
  // Predicated region
  $region18: #{minlstm_forward.1} parent=0 // pred_check
    _
  $region19: #{minlstm_forward.1} parent=0 // pred_check_branch
    %442 = sbr.rel (0) target = $region21
  $region20: #{minlstm_forward.1} parent=0 // pred_region
    _
  $region21: #{minlstm_forward.1} parent=0 // pred_fallthru
    _
  // Predicated region
  $region22: #{minlstm_forward.1} parent=0 // pred_check
    _
  $region23: #{minlstm_forward.1} parent=0 // pred_check_branch
    %444 = sbr.rel (0) target = $region25
  $region24: #{minlstm_forward.1} parent=0 // pred_region
    _
  $region25: #{minlstm_forward.1} parent=0 // pred_fallthru
    _

</llo_original>
